<compile_context>
chip_gen: v5e
topology: v5e:2x2
jax: 0.10.0
libtpu: 0.0.40
codegen_flags: <defaults>
</compile_context>

<pallas_src>
import functools
import math

import jax
import jax.numpy as jnp
from jax.experimental import pallas as pl
from jax.experimental.pallas import tpu as pltpu


def arcmargin_kernel(x_ref, label_ref, w_ref, o_ref, *,
                     s, cos_m, sin_m, th, mm, easy_margin, block_n):
    # x_ref:     (B, D)        raw features (same block every grid step)
    # label_ref: (B, 1) int32  class labels (resident)
    # w_ref:     (block_n, D)  raw weight rows for this output block (streamed)
    # o_ref:     (B, block_n)  output logits block
    j = pl.program_id(0)

    x = x_ref[...].astype(jnp.float32)          # (B, D)
    w = w_ref[...].astype(jnp.float32)          # (block_n, D)
    d = x.shape[-1]

    # F.normalize eps: x / max(||x||, 1e-12)  ==  x * rsqrt(max(sumsq, 1e-24))
    x_inv = jax.lax.rsqrt(
        jnp.maximum(jnp.sum(x * x, axis=-1, keepdims=True), 1e-24))   # (B, 1)

    # Weight row sum-of-squares directly as a (1, block_n) row via a tiny MXU
    # matvec (keeps it in lane layout; no cross-lane relayout, no wn tile).
    ones_row = jnp.ones((1, d), jnp.float32)
    w_sumsq = jax.lax.dot_general(
        ones_row, w * w,
        dimension_numbers=(((1,), (1,)), ((), ())),
        preferred_element_type=jnp.float32)                           # (1, block_n)
    w_inv = jax.lax.rsqrt(jnp.maximum(w_sumsq, 1e-24))

    # NT matmul on RAW operands; normalization folded into the output scaling.
    dotp = jax.lax.dot_general(
        x, w,
        dimension_numbers=(((1,), (1,)), ((), ())),
        preferred_element_type=jnp.float32)                           # (B, block_n)
    cosine = dotp * x_inv * w_inv

    # TODO(synk): for large-B training, emit s*cosine only and fix up the B
    # label columns in the wrapper, to avoid saturating the single EUP slot
    # with a per-logit sqrt.  At small B this fused path is fine.
    sine = jnp.sqrt(jnp.maximum(1.0 - cosine * cosine, 0.0))
    phi = cosine * cos_m - sine * sin_m                               # cos(theta+m)
    if easy_margin:
        phi = jnp.where(cosine > 0.0, phi, cosine)
    else:
        phi = jnp.where(cosine - th > 0.0, phi, cosine - mm)

    # one_hot.scatter_(1, label, 1)  ==  compare global column index to label
    col = jax.lax.broadcasted_iota(jnp.int32, cosine.shape, 1) + j * block_n
    one_hot = col == label_ref[...]                                   # (B,1) bcast

    o_ref[...] = (jnp.where(one_hot, phi, cosine) * s).astype(o_ref.dtype)


def _vmem_capacity_bytes():
    """Physical VMEM of the running chip (64 MiB/core v7x, 128 MiB v5e/v6e)."""
    try:
        info = pltpu.get_tpu_info()
        cap = getattr(info, "vmem_capacity_bytes", None)
        if cap:
            return int(cap)
    except Exception:
        pass
    return 64 * 1024 * 1024   # conservative fallback (v7x per-core)


def _pick_block_and_vmem(N, B, D, w_itemsize, target_block_n):
    """Choose a lane-dense block_n that fits this chip's VMEM, plus a limit."""
    cap = _vmem_capacity_bytes()
    budget = (cap * 3) // 4                       # headroom for compiler scratch

    # Pick block_n so the number of grid steps matches the target, then round
    # up to a multiple of 128 -> minimal zero-padding of the weight rows.
    target = max(128, ((target_block_n + 127) // 128) * 128)
    steps = max(1, -(-N // target))               # ceil(N / target)
    bn = max(128, ((-(-N // steps) + 127) // 128) * 128)

    def working_set(bn):
        return (2 * bn * D * w_itemsize           # double-buffered weight tiles
                + 2 * B * bn * 4                  # double-buffered output tiles
                + B * D * 4 + B * 4               # resident x / label
                + 6 * B * bn * 4)                 # f32 temporaries (cosine/sine/phi/..)

    while bn > 128 and working_set(bn) > budget:
        bn -= 128
    # (If bn ends up modest because of VMEM pressure, pl.Buffered(3) on the
    #  weight BlockSpec is a further small win; not needed at these shapes.)

    vmem_limit = int(min(budget, max(32 * 1024 * 1024, 2 * working_set(bn))))
    return bn, vmem_limit


def arc_margin_forward(x, label, weight, *, s=32.0, m=0.5, easy_margin=False,
                       block_n=2048, weight_stream_dtype=None):
    """x: (B, D) f32, label: (B,) int, weight: (N, D) f32 -> (B, N) f32 logits.

    weight_stream_dtype: optionally jnp.bfloat16 to halve the dominant HBM
    stream (slightly perturbs cosine near the margin threshold); default keeps
    f32 to match the PyTorch module exactly.
    """
    B, D = x.shape
    N, D2 = weight.shape
    assert D == D2

    cos_m, sin_m = math.cos(m), math.sin(m)
    th = math.cos(math.pi - m)
    mm = math.sin(math.pi - m) * m

    if weight_stream_dtype is not None:
        weight = weight.astype(weight_stream_dtype)
    w_itemsize = jnp.dtype(weight.dtype).itemsize

    block_n, vmem_limit = _pick_block_and_vmem(N, B, D, w_itemsize, block_n)

    n_pad = pl.cdiv(N, block_n) * block_n
    w_pad = weight if n_pad == N else jnp.pad(weight, ((0, n_pad - N), (0, 0)))

    label2d = label.reshape(B, 1).astype(jnp.int32)
    grid = (n_pad // block_n,)

    kernel = functools.partial(
        arcmargin_kernel, s=s, cos_m=cos_m, sin_m=sin_m, th=th, mm=mm,
        easy_margin=easy_margin, block_n=block_n)

    cost = pl.CostEstimate(
        flops=2 * B * n_pad * D + 3 * n_pad * D + 8 * B * n_pad,
        transcendentals=B * n_pad + n_pad + B,          # sqrt per logit + rsqrts
        bytes_accessed=(n_pad * D * w_itemsize          # weight stream (dominant)
                        + (B * D + B * n_pad + B) * 4),
    )

    out = pl.pallas_call(
        kernel,
        out_shape=jax.ShapeDtypeStruct((B, n_pad), jnp.float32),
        grid=grid,
        in_specs=[
            pl.BlockSpec((B, D), lambda j: (0, 0)),          # x (resident)
            pl.BlockSpec((B, 1), lambda j: (0, 0)),          # label (resident)
            pl.BlockSpec((block_n, D), lambda j: (j, 0)),    # weight tile (streamed)
        ],
        out_specs=pl.BlockSpec((B, block_n), lambda j: (0, j)),
        compiler_params=pltpu.CompilerParams(
            # "parallel": shard the N axis over both TensorCores on v7x.
            dimension_semantics=("parallel",),
            vmem_limit_bytes=vmem_limit,
        ),
        cost_estimate=cost,
    )(x, label2d, w_pad)

    return out[:, :N]


def reference_forward(x, label, weight, *, s=32.0, m=0.5, easy_margin=False):
    """Pure-JAX reference mirroring the PyTorch forward."""
    cos_m, sin_m = math.cos(m), math.sin(m)
    th = math.cos(math.pi - m)
    mm = math.sin(math.pi - m) * m

    xn = x / jnp.maximum(jnp.linalg.norm(x, axis=1, keepdims=True), 1e-12)
    wn = weight / jnp.maximum(jnp.linalg.norm(weight, axis=1, keepdims=True), 1e-12)
    cosine = xn @ wn.T
    sine = jnp.sqrt(jnp.maximum(1.0 - cosine * cosine, 0.0))
    phi = cosine * cos_m - sine * sin_m
    if easy_margin:
        phi = jnp.where(cosine > 0.0, phi, cosine)
    else:
        phi = jnp.where(cosine - th > 0.0, phi, cosine - mm)
    one_hot = jax.nn.one_hot(label, weight.shape[0], dtype=cosine.dtype)
    return (one_hot * phi + (1.0 - one_hot) * cosine) * s


if __name__ == "__main__":
    # Small shapes consistent with the module (in_feature=128 default; a
    # shrunk out_feature that is NOT a block multiple to exercise padding).
    B, D, N = 4, 128, 1000

    key = jax.random.PRNGKey(0)
    kx, kw, kl = jax.random.split(key, 3)
    x = jax.random.normal(kx, (B, D), dtype=jnp.float32)
    limit = math.sqrt(6.0 / (D + N))                       # xavier_uniform_
    weight = jax.random.uniform(kw, (N, D), dtype=jnp.float32,
                                minval=-limit, maxval=limit)
    label = jax.random.randint(kl, (B,), 0, N, dtype=jnp.int32)

    out = arc_margin_forward(x, label, weight, s=32.0, m=0.5, easy_margin=False)
    out = jax.block_until_ready(out)

    ref = reference_forward(x, label, weight, s=32.0, m=0.5, easy_margin=False)
    assert out.shape == (B, N)
    assert jnp.allclose(out, ref, atol=1e-3, rtol=1e-3), (
        f"mismatch vs reference, max abs diff = {jnp.max(jnp.abs(out - ref))}")

    print("KERNEL_OK")
</pallas_src>

<mosaic_0001>
module attributes {stable_mosaic.version = 11 : i64} {
  func.func @arcmargin_kernel(%arg0: i32, %arg1: memref<4x128xf32, #tpu.memory_space<vmem>>, %arg2: memref<4x1xi32, #tpu.memory_space<vmem>>, %arg3: memref<1024x128xf32, #tpu.memory_space<vmem>>, %arg4: memref<4x1024xf32, #tpu.memory_space<vmem>>) attributes {dimension_semantics = [#tpu.dimension_semantics<parallel>], iteration_bounds = array<i64: 1>, scalar_prefetch = 0 : i64, scratch_operands = 0 : i64, tpu.core_type = #tpu.core_type<tc>, window_params = [{pipeline_mode = #tpu.pipeline_mode<synchronous>, transform_indices = @transform_0, window_bounds = array<i64: 4, 128>}, {pipeline_mode = #tpu.pipeline_mode<synchronous>, transform_indices = @transform_1, window_bounds = array<i64: 4, 1>}, {transform_indices = @transform_2, window_bounds = array<i64: 1024, 128>}, {transform_indices = @transform_3, window_bounds = array<i64: 4, 1024>}]} {
    %c0 = arith.constant 0 : index
    %c0_0 = arith.constant 0 : index
    %0 = vector.load %arg1[%c0, %c0_0] : memref<4x128xf32, #tpu.memory_space<vmem>>, vector<4x128xf32>
    %c0_1 = arith.constant 0 : index
    %c0_2 = arith.constant 0 : index
    %1 = vector.load %arg3[%c0_1, %c0_2] : memref<1024x128xf32, #tpu.memory_space<vmem>>, vector<1024x128xf32>
    %2 = arith.mulf %0, %0 : vector<4x128xf32>
    %cst = arith.constant dense<0.000000e+00> : vector<4xf32>
    %3 = vector.multi_reduction <add>, %2, %cst [1] : vector<4x128xf32> to vector<4xf32>
    %4 = vector.shape_cast %3 : vector<4xf32> to vector<4x1xf32>
    %cst_3 = arith.constant 1.000000e-24 : f32
    %5 = vector.broadcast %cst_3 : f32 to vector<4x1xf32>
    %6 = arith.maximumf %4, %5 : vector<4x1xf32>
    %7 = math.rsqrt %6 : vector<4x1xf32>
    %cst_4 = arith.constant 1.000000e+00 : f32
    %8 = vector.broadcast %cst_4 : f32 to vector<1x128xf32>
    %9 = arith.mulf %1, %1 : vector<1024x128xf32>
    %cst_5 = arith.constant dense<0.000000e+00> : vector<1x1024xf32>
    %10 = tpu.matmul %8, %9, %cst_5 {dimension_numbers = #tpu.dot_dimension_numbers<[1], [1], [0], [0], [0, 0, 1, 0], [], []>} : vector<1x128xf32>, vector<1024x128xf32>, vector<1x1024xf32> -> vector<1x1024xf32>
    %cst_6 = arith.constant 1.000000e-24 : f32
    %11 = vector.broadcast %cst_6 : f32 to vector<1x1024xf32>
    %12 = arith.maximumf %10, %11 : vector<1x1024xf32>
    %13 = math.rsqrt %12 : vector<1x1024xf32>
    %cst_7 = arith.constant dense<0.000000e+00> : vector<4x1024xf32>
    %14 = tpu.matmul %0, %1, %cst_7 {dimension_numbers = #tpu.dot_dimension_numbers<[1], [1], [0], [0], [0, 0, 1, 0], [], []>} : vector<4x128xf32>, vector<1024x128xf32>, vector<4x1024xf32> -> vector<4x1024xf32>
    %15 = vector.broadcast %7 : vector<4x1xf32> to vector<4x1024xf32>
    %16 = arith.mulf %14, %15 : vector<4x1024xf32>
    %17 = vector.broadcast %13 : vector<1x1024xf32> to vector<4x1024xf32>
    %18 = arith.mulf %16, %17 : vector<4x1024xf32>
    %19 = arith.mulf %18, %18 : vector<4x1024xf32>
    %cst_8 = arith.constant 1.000000e+00 : f32
    %20 = vector.broadcast %cst_8 : f32 to vector<4x1024xf32>
    %21 = arith.subf %20, %19 : vector<4x1024xf32>
    %cst_9 = arith.constant 0.000000e+00 : f32
    %22 = vector.broadcast %cst_9 : f32 to vector<4x1024xf32>
    %23 = arith.maximumf %21, %22 : vector<4x1024xf32>
    %24 = math.sqrt %23 : vector<4x1024xf32>
    %cst_10 = arith.constant 0.87758255 : f32
    %25 = vector.broadcast %cst_10 : f32 to vector<4x1024xf32>
    %26 = arith.mulf %18, %25 : vector<4x1024xf32>
    %cst_11 = arith.constant 0.47942555 : f32
    %27 = vector.broadcast %cst_11 : f32 to vector<4x1024xf32>
    %28 = arith.mulf %24, %27 : vector<4x1024xf32>
    %29 = arith.subf %26, %28 : vector<4x1024xf32>
    %cst_12 = arith.constant -0.87758255 : f32
    %30 = vector.broadcast %cst_12 : f32 to vector<4x1024xf32>
    %31 = arith.subf %18, %30 : vector<4x1024xf32>
    %cst_13 = arith.constant 0.000000e+00 : f32
    %32 = vector.broadcast %cst_13 : f32 to vector<4x1024xf32>
    %33 = arith.cmpf ogt, %31, %32 : vector<4x1024xf32>
    %cst_14 = arith.constant 0.239712775 : f32
    %34 = vector.broadcast %cst_14 : f32 to vector<4x1024xf32>
    %35 = arith.subf %18, %34 : vector<4x1024xf32>
    %36 = arith.select %33, %29, %35 : vector<4x1024xi1>, vector<4x1024xf32>
    %37 = tpu.iota {dimensions = array<i32: 1>} : vector<4x1024xi32>
    %c1024_i32 = arith.constant 1024 : i32
    %38 = arith.muli %arg0, %c1024_i32 : i32
    %39 = vector.broadcast %38 : i32 to vector<4x1024xi32>
    %40 = arith.addi %37, %39 : vector<4x1024xi32>
    %c0_15 = arith.constant 0 : index
    %c0_16 = arith.constant 0 : index
    %41 = vector.load %arg2[%c0_15, %c0_16] : memref<4x1xi32, #tpu.memory_space<vmem>>, vector<4x1xi32>
    %42 = vector.broadcast %41 : vector<4x1xi32> to vector<4x1024xi32>
    %43 = arith.cmpi eq, %40, %42 : vector<4x1024xi32>
    %44 = arith.select %43, %36, %18 : vector<4x1024xi1>, vector<4x1024xf32>
    %cst_17 = arith.constant 3.200000e+01 : f32
    %45 = vector.broadcast %cst_17 : f32 to vector<4x1024xf32>
    %46 = arith.mulf %44, %45 : vector<4x1024xf32>
    %c0_18 = arith.constant 0 : index
    %c0_19 = arith.constant 0 : index
    %47 = vector.load %arg4[%c0_18, %c0_19] : memref<4x1024xf32, #tpu.memory_space<vmem>>, vector<4x1024xf32>
    tpu.vector_store %arg4[%c0_18, %c0_19], %46 {strides = array<i32>} : memref<4x1024xf32, #tpu.memory_space<vmem>>, vector<4x1024xf32>,
    return
  }
  func.func @transform_0(%arg0: i32) -> (i32, i32) {
    %c0_i32 = arith.constant 0 : i32
    %c0_i32_0 = arith.constant 0 : i32
    %c0_i32_1 = arith.constant 0 : i32
    return %c0_i32, %c0_i32_0 : i32, i32
  }
  func.func @transform_1(%arg0: i32) -> (i32, i32) {
    %c0_i32 = arith.constant 0 : i32
    %c0_i32_0 = arith.constant 0 : i32
    %c0_i32_1 = arith.constant 0 : i32
    return %c0_i32, %c0_i32_0 : i32, i32
  }
  func.func @transform_2(%arg0: i32) -> (i32, i32) {
    %c0_i32 = arith.constant 0 : i32
    %c0_i32_0 = arith.constant 0 : i32
    return %arg0, %c0_i32 : i32, i32
  }
  func.func @transform_3(%arg0: i32) -> (i32, i32) {
    %c0_i32 = arith.constant 0 : i32
    %c0_i32_0 = arith.constant 0 : i32
    return %c0_i32, %arg0 : i32, i32
  }
}

</mosaic_0001>

<llo_original>
// kernel: tpu_custom_call.1
$region0: #{tpu_custom_call.1}
  #allocation0 [shape = 'u32[]', space=smem, size = 0x4, offset = 0x4, fixed_abs, tag = 'smem constant byte address 0x4 - core index']
  #allocation1 [shape = 'u32[72,128]{1,0:T(1,128)}', space=vmem, size = 0x9000, scoped, tag = 'internal scratch']
  %s0 = inlined_call_operand.vmem [shape: f32[4,128], index: 0, kind: input, shape index: {}]
  %s1 = inlined_call_operand.vmem [shape: s32[4,1], index: 1, kind: input, shape index: {}]
  %s2 = inlined_call_operand.hbm [shape: f32[1024,128], index: 2, kind: input, shape index: {}]
  %s3 = inlined_call_operand.hbm [shape: f32[4,1024], index: 3, kind: output, shape index: {}]
  %s4 = sld [smem:[#allocation0]]
  $region26: #{tpu_custom_call.1} parent=0
    _
  %s6 = ssub.s32 1, %s4
  %s7 = scalar_select 0, %s6, %s4
  $region1: #{tpu_custom_call.1} parent=0
    #allocation2 [shape = 'u8[524288]{0}', space=vmem, size = 0x80000, scoped, tag = 'input window, operand 2, single buffered']
    #allocation3 [shape = 's32[1]{0}', space=sflag, size = 0x4, scoped, tag = 'scoped memory for tpu_custom_call.1']
    #allocation4 [shape = 's32[1]{0}', space=sflag, size = 0x4, scoped, tag = 'scoped memory for tpu_custom_call.1']
    #allocation5 [shape = 'u8[16384]{0}', space=vmem, size = 0x4000, scoped, tag = 'output window, operand 0, single buffered']
    %8 = vsyncpa [#allocation3], 0
    %9 = vsyncpa [#allocation4], 0
    // Predicated region
    $region2: #{tpu_custom_call.1} parent=1 // pred_check
      _
    $region3: #{tpu_custom_call.1} parent=1 // pred_check_branch
      %11 = sbr.rel (0) target = $region5
    $region4: #{tpu_custom_call.1} parent=1 // pred_region
      _
    $region5: #{tpu_custom_call.1} parent=1 // pred_fallthru
      _
    // Predicated region
    $region6: #{tpu_custom_call.1} parent=1 // pred_check
      _
    $region7: #{tpu_custom_call.1} parent=1 // pred_check_branch
      %13 = sbr.rel (0) target = $region9
    $region8: #{tpu_custom_call.1} parent=1 // pred_region
      _
    $region9: #{tpu_custom_call.1} parent=1 // pred_fallthru
      _
    // Predicated region
    $region10: #{tpu_custom_call.1} parent=1 // pred_check
      _
    $region11: #{tpu_custom_call.1} parent=1 // pred_check_branch
      %15 = sbr.rel (0) target = $region13
    $region12: #{tpu_custom_call.1} parent=1 // pred_region
      %17 = vsyncadd [#allocation3], 0
      %s18 = sshll.u32 %s2, 4
      %s19 = int_to_ptr.hbm [resolvable:$true] %s18
      %s20 = sshll.u32 [#allocation2], 4
      %s21 = int_to_ptr.vmem [resolvable:$true] %s20
      %26 = dma.hbm_to_vmem [thread:$0]  %s19, 16384, %s21, [#allocation3], 128, 128, 8
    $region13: #{tpu_custom_call.1} parent=1 // pred_fallthru
      _
    // Predicated region
    $region14: #{tpu_custom_call.1} parent=1 // pred_check
      _
    $region15: #{tpu_custom_call.1} parent=1 // pred_check_branch
      %28 = sbr.rel (0) target = $region17
    $region16: #{tpu_custom_call.1} parent=1 // pred_region
      %30 = dma.done [#allocation3], 16384
    $region17: #{tpu_custom_call.1} parent=1 // pred_fallthru
      _
    %v31 = vld [vmem:[%s0] sm:$0xf]
    %v32 = vld [vmem:[#allocation2] sm:$0xff]
    %v33 = vld [vmem:[#allocation2 + $0x8] sm:$0xff]
    %v34 = vld [vmem:[#allocation2 + $0x10] sm:$0xff]
    %v35 = vld [vmem:[#allocation2 + $0x18] sm:$0xff]
    %v36 = vld [vmem:[#allocation2 + $0x20] sm:$0xff]
    %v37 = vld [vmem:[#allocation2 + $0x28] sm:$0xff]
    %v38 = vld [vmem:[#allocation2 + $0x30] sm:$0xff]
    %v39 = vld [vmem:[#allocation2 + $0x38] sm:$0xff]
    %v40 = vld [vmem:[#allocation2 + $0x40] sm:$0xff]
    %v41 = vld [vmem:[#allocation2 + $0x48] sm:$0xff]
    %v42 = vld [vmem:[#allocation2 + $0x50] sm:$0xff]
    %v43 = vld [vmem:[#allocation2 + $0x58] sm:$0xff]
    %v44 = vld [vmem:[#allocation2 + $0x60] sm:$0xff]
    %v45 = vld [vmem:[#allocation2 + $0x68] sm:$0xff]
    %v46 = vld [vmem:[#allocation2 + $0x70] sm:$0xff]
    %v47 = vld [vmem:[#allocation2 + $0x78] sm:$0xff]
    %v48 = vld [vmem:[#allocation2 + $0x80] sm:$0xff]
    %v49 = vld [vmem:[#allocation2 + $0x88] sm:$0xff]
    %v50 = vld [vmem:[#allocation2 + $0x90] sm:$0xff]
    %v51 = vld [vmem:[#allocation2 + $0x98] sm:$0xff]
    %v52 = vld [vmem:[#allocation2 + $0xa0] sm:$0xff]
    %v53 = vld [vmem:[#allocation2 + $0xa8] sm:$0xff]
    %v54 = vld [vmem:[#allocation2 + $0xb0] sm:$0xff]
    %v55 = vld [vmem:[#allocation2 + $0xb8] sm:$0xff]
    %v56 = vld [vmem:[#allocation2 + $0xc0] sm:$0xff]
    %v57 = vld [vmem:[#allocation2 + $0xc8] sm:$0xff]
    %v58 = vld [vmem:[#allocation2 + $0xd0] sm:$0xff]
    %v59 = vld [vmem:[#allocation2 + $0xd8] sm:$0xff]
    %v60 = vld [vmem:[#allocation2 + $0xe0] sm:$0xff]
    %v61 = vld [vmem:[#allocation2 + $0xe8] sm:$0xff]
    %v62 = vld [vmem:[#allocation2 + $0xf0] sm:$0xff]
    %v63 = vld [vmem:[#allocation2 + $0xf8] sm:$0xff]
    %v64 = vld [vmem:[#allocation2 + $0x100] sm:$0xff]
    %v65 = vld [vmem:[#allocation2 + $0x108] sm:$0xff]
    %v66 = vld [vmem:[#allocation2 + $0x110] sm:$0xff]
    %v67 = vld [vmem:[#allocation2 + $0x118] sm:$0xff]
    %v68 = vld [vmem:[#allocation2 + $0x120] sm:$0xff]
    %v69 = vld [vmem:[#allocation2 + $0x128] sm:$0xff]
    %v70 = vld [vmem:[#allocation2 + $0x130] sm:$0xff]
    %v71 = vld [vmem:[#allocation2 + $0x138] sm:$0xff]
    %v72 = vld [vmem:[#allocation2 + $0x140] sm:$0xff]
    %v73 = vld [vmem:[#allocation2 + $0x148] sm:$0xff]
    %v74 = vld [vmem:[#allocation2 + $0x150] sm:$0xff]
    %v75 = vld [vmem:[#allocation2 + $0x158] sm:$0xff]
    %v76 = vld [vmem:[#allocation2 + $0x160] sm:$0xff]
    %v77 = vld [vmem:[#allocation2 + $0x168] sm:$0xff]
    %v78 = vld [vmem:[#allocation2 + $0x170] sm:$0xff]
    %v79 = vld [vmem:[#allocation2 + $0x178] sm:$0xff]
    %v80 = vld [vmem:[#allocation2 + $0x180] sm:$0xff]
    %v81 = vld [vmem:[#allocation2 + $0x188] sm:$0xff]
    %v82 = vld [vmem:[#allocation2 + $0x190] sm:$0xff]
    %v83 = vld [vmem:[#allocation2 + $0x198] sm:$0xff]
    %v84 = vld [vmem:[#allocation2 + $0x1a0] sm:$0xff]
    %v85 = vld [vmem:[#allocation2 + $0x1a8] sm:$0xff]
    %v86 = vld [vmem:[#allocation2 + $0x1b0] sm:$0xff]
    %v87 = vld [vmem:[#allocation2 + $0x1b8] sm:$0xff]
    %v88 = vld [vmem:[#allocation2 + $0x1c0] sm:$0xff]
    %v89 = vld [vmem:[#allocation2 + $0x1c8] sm:$0xff]
    %v90 = vld [vmem:[#allocation2 + $0x1d0] sm:$0xff]
    %v91 = vld [vmem:[#allocation2 + $0x1d8] sm:$0xff]
    %v92 = vld [vmem:[#allocation2 + $0x1e0] sm:$0xff]
    %v93 = vld [vmem:[#allocation2 + $0x1e8] sm:$0xff]
    %v94 = vld [vmem:[#allocation2 + $0x1f0] sm:$0xff]
    %v95 = vld [vmem:[#allocation2 + $0x1f8] sm:$0xff]
    %v96 = vld [vmem:[#allocation2 + $0x200] sm:$0xff]
    %v97 = vld [vmem:[#allocation2 + $0x208] sm:$0xff]
    %v98 = vld [vmem:[#allocation2 + $0x210] sm:$0xff]
    %v99 = vld [vmem:[#allocation2 + $0x218] sm:$0xff]
    %v100 = vld [vmem:[#allocation2 + $0x220] sm:$0xff]
    %v101 = vld [vmem:[#allocation2 + $0x228] sm:$0xff]
    %v102 = vld [vmem:[#allocation2 + $0x230] sm:$0xff]
    %v103 = vld [vmem:[#allocation2 + $0x238] sm:$0xff]
    %v104 = vld [vmem:[#allocation2 + $0x240] sm:$0xff]
    %v105 = vld [vmem:[#allocation2 + $0x248] sm:$0xff]
    %v106 = vld [vmem:[#allocation2 + $0x250] sm:$0xff]
    %v107 = vld [vmem:[#allocation2 + $0x258] sm:$0xff]
    %v108 = vld [vmem:[#allocation2 + $0x260] sm:$0xff]
    %v109 = vld [vmem:[#allocation2 + $0x268] sm:$0xff]
    %v110 = vld [vmem:[#allocation2 + $0x270] sm:$0xff]
    %v111 = vld [vmem:[#allocation2 + $0x278] sm:$0xff]
    %v112 = vld [vmem:[#allocation2 + $0x280] sm:$0xff]
    %v113 = vld [vmem:[#allocation2 + $0x288] sm:$0xff]
    %v114 = vld [vmem:[#allocation2 + $0x290] sm:$0xff]
    %v115 = vld [vmem:[#allocation2 + $0x298] sm:$0xff]
    %v116 = vld [vmem:[#allocation2 + $0x2a0] sm:$0xff]
    %v117 = vld [vmem:[#allocation2 + $0x2a8] sm:$0xff]
    %v118 = vld [vmem:[#allocation2 + $0x2b0] sm:$0xff]
    %v119 = vld [vmem:[#allocation2 + $0x2b8] sm:$0xff]
    %v120 = vld [vmem:[#allocation2 + $0x2c0] sm:$0xff]
    %v121 = vld [vmem:[#allocation2 + $0x2c8] sm:$0xff]
    %v122 = vld [vmem:[#allocation2 + $0x2d0] sm:$0xff]
    %v123 = vld [vmem:[#allocation2 + $0x2d8] sm:$0xff]
    %v124 = vld [vmem:[#allocation2 + $0x2e0] sm:$0xff]
    %v125 = vld [vmem:[#allocation2 + $0x2e8] sm:$0xff]
    %v126 = vld [vmem:[#allocation2 + $0x2f0] sm:$0xff]
    %v127 = vld [vmem:[#allocation2 + $0x2f8] sm:$0xff]
    %v128 = vld [vmem:[#allocation2 + $0x300] sm:$0xff]
    %v129 = vld [vmem:[#allocation2 + $0x308] sm:$0xff]
    %v130 = vld [vmem:[#allocation2 + $0x310] sm:$0xff]
    %v131 = vld [vmem:[#allocation2 + $0x318] sm:$0xff]
    %v132 = vld [vmem:[#allocation2 + $0x320] sm:$0xff]
    %v133 = vld [vmem:[#allocation2 + $0x328] sm:$0xff]
    %v134 = vld [vmem:[#allocation2 + $0x330] sm:$0xff]
    %v135 = vld [vmem:[#allocation2 + $0x338] sm:$0xff]
    %v136 = vld [vmem:[#allocation2 + $0x340] sm:$0xff]
    %v137 = vld [vmem:[#allocation2 + $0x348] sm:$0xff]
    %v138 = vld [vmem:[#allocation2 + $0x350] sm:$0xff]
    %v139 = vld [vmem:[#allocation2 + $0x358] sm:$0xff]
    %v140 = vld [vmem:[#allocation2 + $0x360] sm:$0xff]
    %v141 = vld [vmem:[#allocation2 + $0x368] sm:$0xff]
    %v142 = vld [vmem:[#allocation2 + $0x370] sm:$0xff]
    %v143 = vld [vmem:[#allocation2 + $0x378] sm:$0xff]
    %v144 = vld [vmem:[#allocation2 + $0x380] sm:$0xff]
    %v145 = vld [vmem:[#allocation2 + $0x388] sm:$0xff]
    %v146 = vld [vmem:[#allocation2 + $0x390] sm:$0xff]
    %v147 = vld [vmem:[#allocation2 + $0x398] sm:$0xff]
    %v148 = vld [vmem:[#allocation2 + $0x3a0] sm:$0xff]
    %v149 = vld [vmem:[#allocation2 + $0x3a8] sm:$0xff]
    %v150 = vld [vmem:[#allocation2 + $0x3b0] sm:$0xff]
    %v151 = vld [vmem:[#allocation2 + $0x3b8] sm:$0xff]
    %v152 = vld [vmem:[#allocation2 + $0x3c0] sm:$0xff]
    %v153 = vld [vmem:[#allocation2 + $0x3c8] sm:$0xff]
    %v154 = vld [vmem:[#allocation2 + $0x3d0] sm:$0xff]
    %v155 = vld [vmem:[#allocation2 + $0x3d8] sm:$0xff]
    %v156 = vld [vmem:[#allocation2 + $0x3e0] sm:$0xff]
    %v157 = vld [vmem:[#allocation2 + $0x3e8] sm:$0xff]
    %v158 = vld [vmem:[#allocation2 + $0x3f0] sm:$0xff]
    %v159 = vld [vmem:[#allocation2 + $0x3f8] sm:$0xff]
    %v160 = vmul.f32 %v31, %v31
    %vm161 = vcmask 1043456
    %v162 = vsel %vm161, %v160, 0.0
    %163 = vadd.xlane.f32.xlu0 %v162
    %v164 = vpop.xlane.xlu0 %163
    %v165 = vmax.f32 %v164, 1e-24
    %v166 = vrsqrt.pop %v165
    %v167 = vmul.f32 %v166, %v165
    %v168 = vmul.f32 %v167, %v166
    %v169 = vmul.f32 0.5, %v168
    %v170 = vsub.f32 1.5, %v169
    %v171 = vmul.f32 %v166, %v170
    %vm172 = vweird.f32 %v165
    %vm173 = vweird.f32 %v166
    %vm174 = vmor %vm172, %vm173
    %v175 = vsel %vm174, %v166, %v171
    %v176 = vmul.f32 %v32, %v32
    %v177 = vmul.f32 %v33, %v33
    %v178 = vmul.f32 %v34, %v34
    %v179 = vmul.f32 %v35, %v35
    %v180 = vmul.f32 %v36, %v36
    %v181 = vmul.f32 %v37, %v37
    %v182 = vmul.f32 %v38, %v38
    %v183 = vmul.f32 %v39, %v39
    %v184 = vmul.f32 %v40, %v40
    %v185 = vmul.f32 %v41, %v41
    %v186 = vmul.f32 %v42, %v42
    %v187 = vmul.f32 %v43, %v43
    %v188 = vmul.f32 %v44, %v44
    %v189 = vmul.f32 %v45, %v45
    %v190 = vmul.f32 %v46, %v46
    %v191 = vmul.f32 %v47, %v47
    %v192 = vmul.f32 %v48, %v48
    %v193 = vmul.f32 %v49, %v49
    %v194 = vmul.f32 %v50, %v50
    %v195 = vmul.f32 %v51, %v51
    %v196 = vmul.f32 %v52, %v52
    %v197 = vmul.f32 %v53, %v53
    %v198 = vmul.f32 %v54, %v54
    %v199 = vmul.f32 %v55, %v55
    %v200 = vmul.f32 %v56, %v56
    %v201 = vmul.f32 %v57, %v57
    %v202 = vmul.f32 %v58, %v58
    %v203 = vmul.f32 %v59, %v59
    %v204 = vmul.f32 %v60, %v60
    %v205 = vmul.f32 %v61, %v61
    %v206 = vmul.f32 %v62, %v62
    %v207 = vmul.f32 %v63, %v63
    %v208 = vmul.f32 %v64, %v64
    %v209 = vmul.f32 %v65, %v65
    %v210 = vmul.f32 %v66, %v66
    %v211 = vmul.f32 %v67, %v67
    %v212 = vmul.f32 %v68, %v68
    %v213 = vmul.f32 %v69, %v69
    %v214 = vmul.f32 %v70, %v70
    %v215 = vmul.f32 %v71, %v71
    %v216 = vmul.f32 %v72, %v72
    %v217 = vmul.f32 %v73, %v73
    %v218 = vmul.f32 %v74, %v74
    %v219 = vmul.f32 %v75, %v75
    %v220 = vmul.f32 %v76, %v76
    %v221 = vmul.f32 %v77, %v77
    %v222 = vmul.f32 %v78, %v78
    %v223 = vmul.f32 %v79, %v79
    %v224 = vmul.f32 %v80, %v80
    %v225 = vmul.f32 %v81, %v81
    %v226 = vmul.f32 %v82, %v82
    %v227 = vmul.f32 %v83, %v83
    %v228 = vmul.f32 %v84, %v84
    %v229 = vmul.f32 %v85, %v85
    %v230 = vmul.f32 %v86, %v86
    %v231 = vmul.f32 %v87, %v87
    %v232 = vmul.f32 %v88, %v88
    %v233 = vmul.f32 %v89, %v89
    %v234 = vmul.f32 %v90, %v90
    %v235 = vmul.f32 %v91, %v91
    %v236 = vmul.f32 %v92, %v92
    %v237 = vmul.f32 %v93, %v93
    %v238 = vmul.f32 %v94, %v94
    %v239 = vmul.f32 %v95, %v95
    %v240 = vmul.f32 %v96, %v96
    %v241 = vmul.f32 %v97, %v97
    %v242 = vmul.f32 %v98, %v98
    %v243 = vmul.f32 %v99, %v99
    %v244 = vmul.f32 %v100, %v100
    %v245 = vmul.f32 %v101, %v101
    %v246 = vmul.f32 %v102, %v102
    %v247 = vmul.f32 %v103, %v103
    %v248 = vmul.f32 %v104, %v104
    %v249 = vmul.f32 %v105, %v105
    %v250 = vmul.f32 %v106, %v106
    %v251 = vmul.f32 %v107, %v107
    %v252 = vmul.f32 %v108, %v108
    %v253 = vmul.f32 %v109, %v109
    %v254 = vmul.f32 %v110, %v110
    %v255 = vmul.f32 %v111, %v111
    %v256 = vmul.f32 %v112, %v112
    %v257 = vmul.f32 %v113, %v113
    %v258 = vmul.f32 %v114, %v114
    %v259 = vmul.f32 %v115, %v115
    %v260 = vmul.f32 %v116, %v116
    %v261 = vmul.f32 %v117, %v117
    %v262 = vmul.f32 %v118, %v118
    %v263 = vmul.f32 %v119, %v119
    %v264 = vmul.f32 %v120, %v120
    %v265 = vmul.f32 %v121, %v121
    %v266 = vmul.f32 %v122, %v122
    %v267 = vmul.f32 %v123, %v123
    %v268 = vmul.f32 %v124, %v124
    %v269 = vmul.f32 %v125, %v125
    %v270 = vmul.f32 %v126, %v126
    %v271 = vmul.f32 %v127, %v127
    %v272 = vmul.f32 %v128, %v128
    %v273 = vmul.f32 %v129, %v129
    %v274 = vmul.f32 %v130, %v130
    %v275 = vmul.f32 %v131, %v131
    %v276 = vmul.f32 %v132, %v132
    %v277 = vmul.f32 %v133, %v133
    %v278 = vmul.f32 %v134, %v134
    %v279 = vmul.f32 %v135, %v135
    %v280 = vmul.f32 %v136, %v136
    %v281 = vmul.f32 %v137, %v137
    %v282 = vmul.f32 %v138, %v138
    %v283 = vmul.f32 %v139, %v139
    %v284 = vmul.f32 %v140, %v140
    %v285 = vmul.f32 %v141, %v141
    %v286 = vmul.f32 %v142, %v142
    %v287 = vmul.f32 %v143, %v143
    %v288 = vmul.f32 %v144, %v144
    %v289 = vmul.f32 %v145, %v145
    %v290 = vmul.f32 %v146, %v146
    %v291 = vmul.f32 %v147, %v147
    %v292 = vmul.f32 %v148, %v148
    %v293 = vmul.f32 %v149, %v149
    %v294 = vmul.f32 %v150, %v150
    %v295 = vmul.f32 %v151, %v151
    %v296 = vmul.f32 %v152, %v152
    %v297 = vmul.f32 %v153, %v153
    %v298 = vmul.f32 %v154, %v154
    %v299 = vmul.f32 %v155, %v155
    %v300 = vmul.f32 %v156, %v156
    %v301 = vmul.f32 %v157, %v157
    %v302 = vmul.f32 %v158, %v158
    %v303 = vmul.f32 %v159, %v159
    %304 = vmatpush.xpose.msra.mxu0 %v191
    %305 = vmatpush.xpose.msra.mxu0 %v190
    %306 = vmatpush.xpose.msra.mxu0 %v189
    %307 = vmatpush.xpose.msra.mxu0 %v188
    %308 = vmatpush.xpose.msra.mxu0 %v187
    %309 = vmatpush.xpose.msra.mxu0 %v186
    %310 = vmatpush.xpose.msra.mxu0 %v185
    %311 = vmatpush.xpose.msra.mxu0 %v184
    %312 = vmatpush.xpose.msra.mxu0 %v183
    %313 = vmatpush.xpose.msra.mxu0 %v182
    %314 = vmatpush.xpose.msra.mxu0 %v181
    %315 = vmatpush.xpose.msra.mxu0 %v180
    %316 = vmatpush.xpose.msra.mxu0 %v179
    %317 = vmatpush.xpose.msra.mxu0 %v178
    %318 = vmatpush.xpose.msra.mxu0 %v177
    %319 = vmatpush.xpose.msra.mxu0 %v176
    %320 = vmatmul.f32.gmra.mxu0 1.0
    %v321 = vpop.f32.mrf.mxu0
    %v322 = vadd.f32 0.0, %v321
    %323 = vdwg.mxu0
    %324 = vmatpush.xpose.msra.mxu0 %v207
    %325 = vmatpush.xpose.msra.mxu0 %v206
    %326 = vmatpush.xpose.msra.mxu0 %v205
    %327 = vmatpush.xpose.msra.mxu0 %v204
    %328 = vmatpush.xpose.msra.mxu0 %v203
    %329 = vmatpush.xpose.msra.mxu0 %v202
    %330 = vmatpush.xpose.msra.mxu0 %v201
    %331 = vmatpush.xpose.msra.mxu0 %v200
    %332 = vmatpush.xpose.msra.mxu0 %v199
    %333 = vmatpush.xpose.msra.mxu0 %v198
    %334 = vmatpush.xpose.msra.mxu0 %v197
    %335 = vmatpush.xpose.msra.mxu0 %v196
    %336 = vmatpush.xpose.msra.mxu0 %v195
    %337 = vmatpush.xpose.msra.mxu0 %v194
    %338 = vmatpush.xpose.msra.mxu0 %v193
    %339 = vmatpush.xpose.msra.mxu0 %v192
    %340 = vmatmul.f32.gmra.mxu0 1.0
    %v341 = vpop.f32.mrf.mxu0
    %v342 = vadd.f32 0.0, %v341
    %343 = vdwg.mxu0
    %344 = vmatpush.xpose.msra.mxu0 %v223
    %345 = vmatpush.xpose.msra.mxu0 %v222
    %346 = vmatpush.xpose.msra.mxu0 %v221
    %347 = vmatpush.xpose.msra.mxu0 %v220
    %348 = vmatpush.xpose.msra.mxu0 %v219
    %349 = vmatpush.xpose.msra.mxu0 %v218
    %350 = vmatpush.xpose.msra.mxu0 %v217
    %351 = vmatpush.xpose.msra.mxu0 %v216
    %352 = vmatpush.xpose.msra.mxu0 %v215
    %353 = vmatpush.xpose.msra.mxu0 %v214
    %354 = vmatpush.xpose.msra.mxu0 %v213
    %355 = vmatpush.xpose.msra.mxu0 %v212
    %356 = vmatpush.xpose.msra.mxu0 %v211
    %357 = vmatpush.xpose.msra.mxu0 %v210
    %358 = vmatpush.xpose.msra.mxu0 %v209
    %359 = vmatpush.xpose.msra.mxu0 %v208
    %360 = vmatmul.f32.gmra.mxu0 1.0
    %v361 = vpop.f32.mrf.mxu0
    %v362 = vadd.f32 0.0, %v361
    %363 = vdwg.mxu0
    %364 = vmatpush.xpose.msra.mxu0 %v239
    %365 = vmatpush.xpose.msra.mxu0 %v238
    %366 = vmatpush.xpose.msra.mxu0 %v237
    %367 = vmatpush.xpose.msra.mxu0 %v236
    %368 = vmatpush.xpose.msra.mxu0 %v235
    %369 = vmatpush.xpose.msra.mxu0 %v234
    %370 = vmatpush.xpose.msra.mxu0 %v233
    %371 = vmatpush.xpose.msra.mxu0 %v232
    %372 = vmatpush.xpose.msra.mxu0 %v231
    %373 = vmatpush.xpose.msra.mxu0 %v230
    %374 = vmatpush.xpose.msra.mxu0 %v229
    %375 = vmatpush.xpose.msra.mxu0 %v228
    %376 = vmatpush.xpose.msra.mxu0 %v227
    %377 = vmatpush.xpose.msra.mxu0 %v226
    %378 = vmatpush.xpose.msra.mxu0 %v225
    %379 = vmatpush.xpose.msra.mxu0 %v224
    %380 = vmatmul.f32.gmra.mxu0 1.0
    %v381 = vpop.f32.mrf.mxu0
    %v382 = vadd.f32 0.0, %v381
    %383 = vdwg.mxu0
    %384 = vmatpush.xpose.msra.mxu0 %v255
    %385 = vmatpush.xpose.msra.mxu0 %v254
    %386 = vmatpush.xpose.msra.mxu0 %v253
    %387 = vmatpush.xpose.msra.mxu0 %v252
    %388 = vmatpush.xpose.msra.mxu0 %v251
    %389 = vmatpush.xpose.msra.mxu0 %v250
    %390 = vmatpush.xpose.msra.mxu0 %v249
    %391 = vmatpush.xpose.msra.mxu0 %v248
    %392 = vmatpush.xpose.msra.mxu0 %v247
    %393 = vmatpush.xpose.msra.mxu0 %v246
    %394 = vmatpush.xpose.msra.mxu0 %v245
    %395 = vmatpush.xpose.msra.mxu0 %v244
    %396 = vmatpush.xpose.msra.mxu0 %v243
    %397 = vmatpush.xpose.msra.mxu0 %v242
    %398 = vmatpush.xpose.msra.mxu0 %v241
    %399 = vmatpush.xpose.msra.mxu0 %v240
    %400 = vmatmul.f32.gmra.mxu0 1.0
    %v401 = vpop.f32.mrf.mxu0
    %v402 = vadd.f32 0.0, %v401
    %403 = vdwg.mxu0
    %404 = vmatpush.xpose.msra.mxu0 %v271
    %405 = vmatpush.xpose.msra.mxu0 %v270
    %406 = vmatpush.xpose.msra.mxu0 %v269
    %407 = vmatpush.xpose.msra.mxu0 %v268
    %408 = vmatpush.xpose.msra.mxu0 %v267
    %409 = vmatpush.xpose.msra.mxu0 %v266
    %410 = vmatpush.xpose.msra.mxu0 %v265
    %411 = vmatpush.xpose.msra.mxu0 %v264
    %412 = vmatpush.xpose.msra.mxu0 %v263
    %413 = vmatpush.xpose.msra.mxu0 %v262
    %414 = vmatpush.xpose.msra.mxu0 %v261
    %415 = vmatpush.xpose.msra.mxu0 %v260
    %416 = vmatpush.xpose.msra.mxu0 %v259
    %417 = vmatpush.xpose.msra.mxu0 %v258
    %418 = vmatpush.xpose.msra.mxu0 %v257
    %419 = vmatpush.xpose.msra.mxu0 %v256
    %420 = vmatmul.f32.gmra.mxu0 1.0
    %v421 = vpop.f32.mrf.mxu0
    %v422 = vadd.f32 0.0, %v421
    %423 = vdwg.mxu0
    %424 = vmatpush.xpose.msra.mxu0 %v287
    %425 = vmatpush.xpose.msra.mxu0 %v286
    %426 = vmatpush.xpose.msra.mxu0 %v285
    %427 = vmatpush.xpose.msra.mxu0 %v284
    %428 = vmatpush.xpose.msra.mxu0 %v283
    %429 = vmatpush.xpose.msra.mxu0 %v282
    %430 = vmatpush.xpose.msra.mxu0 %v281
    %431 = vmatpush.xpose.msra.mxu0 %v280
    %432 = vmatpush.xpose.msra.mxu0 %v279
    %433 = vmatpush.xpose.msra.mxu0 %v278
    %434 = vmatpush.xpose.msra.mxu0 %v277
    %435 = vmatpush.xpose.msra.mxu0 %v276
    %436 = vmatpush.xpose.msra.mxu0 %v275
    %437 = vmatpush.xpose.msra.mxu0 %v274
    %438 = vmatpush.xpose.msra.mxu0 %v273
    %439 = vmatpush.xpose.msra.mxu0 %v272
    %440 = vmatmul.f32.gmra.mxu0 1.0
    %v441 = vpop.f32.mrf.mxu0
    %v442 = vadd.f32 0.0, %v441
    %443 = vdwg.mxu0
    %444 = vmatpush.xpose.msra.mxu0 %v303
    %445 = vmatpush.xpose.msra.mxu0 %v302
    %446 = vmatpush.xpose.msra.mxu0 %v301
    %447 = vmatpush.xpose.msra.mxu0 %v300
    %448 = vmatpush.xpose.msra.mxu0 %v299
    %449 = vmatpush.xpose.msra.mxu0 %v298
    %450 = vmatpush.xpose.msra.mxu0 %v297
    %451 = vmatpush.xpose.msra.mxu0 %v296
    %452 = vmatpush.xpose.msra.mxu0 %v295
    %453 = vmatpush.xpose.msra.mxu0 %v294
    %454 = vmatpush.xpose.msra.mxu0 %v293
    %455 = vmatpush.xpose.msra.mxu0 %v292
    %456 = vmatpush.xpose.msra.mxu0 %v291
    %457 = vmatpush.xpose.msra.mxu0 %v290
    %458 = vmatpush.xpose.msra.mxu0 %v289
    %459 = vmatpush.xpose.msra.mxu0 %v288
    %460 = vmatmul.f32.gmra.mxu0 1.0
    %v461 = vpop.f32.mrf.mxu0
    %v462 = vadd.f32 0.0, %v461
    %463 = vdwg.mxu0
    %v464 = vmax.f32 %v322, 1e-24
    %v465 = vmax.f32 %v342, 1e-24
    %v466 = vmax.f32 %v362, 1e-24
    %v467 = vmax.f32 %v382, 1e-24
    %v468 = vmax.f32 %v402, 1e-24
    %v469 = vmax.f32 %v422, 1e-24
    %v470 = vmax.f32 %v442, 1e-24
    %v471 = vmax.f32 %v462, 1e-24
    %v472 = vrsqrt.pop %v464
    %v473 = vmul.f32 %v472, %v464
    %v474 = vmul.f32 %v473, %v472
    %v475 = vmul.f32 0.5, %v474
    %v476 = vsub.f32 1.5, %v475
    %v477 = vmul.f32 %v472, %v476
    %vm478 = vweird.f32 %v464
    %vm479 = vweird.f32 %v472
    %vm480 = vmor %vm478, %vm479
    %v481 = vsel %vm480, %v472, %v477
    %v482 = vrsqrt.pop %v465
    %v483 = vmul.f32 %v482, %v465
    %v484 = vmul.f32 %v483, %v482
    %v485 = vmul.f32 0.5, %v484
    %v486 = vsub.f32 1.5, %v485
    %v487 = vmul.f32 %v482, %v486
    %vm488 = vweird.f32 %v465
    %vm489 = vweird.f32 %v482
    %vm490 = vmor %vm488, %vm489
    %v491 = vsel %vm490, %v482, %v487
    %v492 = vrsqrt.pop %v466
    %v493 = vmul.f32 %v492, %v466
    %v494 = vmul.f32 %v493, %v492
    %v495 = vmul.f32 0.5, %v494
    %v496 = vsub.f32 1.5, %v495
    %v497 = vmul.f32 %v492, %v496
    %vm498 = vweird.f32 %v466
    %vm499 = vweird.f32 %v492
    %vm500 = vmor %vm498, %vm499
    %v501 = vsel %vm500, %v492, %v497
    %v502 = vrsqrt.pop %v467
    %v503 = vmul.f32 %v502, %v467
    %v504 = vmul.f32 %v503, %v502
    %v505 = vmul.f32 0.5, %v504
    %v506 = vsub.f32 1.5, %v505
    %v507 = vmul.f32 %v502, %v506
    %vm508 = vweird.f32 %v467
    %vm509 = vweird.f32 %v502
    %vm510 = vmor %vm508, %vm509
    %v511 = vsel %vm510, %v502, %v507
    %v512 = vrsqrt.pop %v468
    %v513 = vmul.f32 %v512, %v468
    %v514 = vmul.f32 %v513, %v512
    %v515 = vmul.f32 0.5, %v514
    %v516 = vsub.f32 1.5, %v515
    %v517 = vmul.f32 %v512, %v516
    %vm518 = vweird.f32 %v468
    %vm519 = vweird.f32 %v512
    %vm520 = vmor %vm518, %vm519
    %v521 = vsel %vm520, %v512, %v517
    %v522 = vrsqrt.pop %v469
    %v523 = vmul.f32 %v522, %v469
    %v524 = vmul.f32 %v523, %v522
    %v525 = vmul.f32 0.5, %v524
    %v526 = vsub.f32 1.5, %v525
    %v527 = vmul.f32 %v522, %v526
    %vm528 = vweird.f32 %v469
    %vm529 = vweird.f32 %v522
    %vm530 = vmor %vm528, %vm529
    %v531 = vsel %vm530, %v522, %v527
    %v532 = vrsqrt.pop %v470
    %v533 = vmul.f32 %v532, %v470
    %v534 = vmul.f32 %v533, %v532
    %v535 = vmul.f32 0.5, %v534
    %v536 = vsub.f32 1.5, %v535
    %v537 = vmul.f32 %v532, %v536
    %vm538 = vweird.f32 %v470
    %vm539 = vweird.f32 %v532
    %vm540 = vmor %vm538, %vm539
    %v541 = vsel %vm540, %v532, %v537
    %v542 = vrsqrt.pop %v471
    %v543 = vmul.f32 %v542, %v471
    %v544 = vmul.f32 %v543, %v542
    %v545 = vmul.f32 0.5, %v544
    %v546 = vsub.f32 1.5, %v545
    %v547 = vmul.f32 %v542, %v546
    %vm548 = vweird.f32 %v471
    %vm549 = vweird.f32 %v542
    %vm550 = vmor %vm548, %vm549
    %v551 = vsel %vm550, %v542, %v547
    %552 = vmatpush.xpose.msra.mxu0 %v47
    %553 = vmatpush.xpose.msra.mxu0 %v46
    %554 = vmatpush.xpose.msra.mxu0 %v45
    %555 = vmatpush.xpose.msra.mxu0 %v44
    %556 = vmatpush.xpose.msra.mxu0 %v43
    %557 = vmatpush.xpose.msra.mxu0 %v42
    %558 = vmatpush.xpose.msra.mxu0 %v41
    %559 = vmatpush.xpose.msra.mxu0 %v40
    %560 = vmatpush.xpose.msra.mxu0 %v39
    %561 = vmatpush.xpose.msra.mxu0 %v38
    %562 = vmatpush.xpose.msra.mxu0 %v37
    %563 = vmatpush.xpose.msra.mxu0 %v36
    %564 = vmatpush.xpose.msra.mxu0 %v35
    %565 = vmatpush.xpose.msra.mxu0 %v34
    %566 = vmatpush.xpose.msra.mxu0 %v33
    %567 = vmatpush.xpose.msra.mxu0 %v32
    %568 = vmatmul.f32.gmra.mxu0 %v31
    %v569 = vpop.f32.mrf.mxu0
    %v570 = vadd.f32 0.0, %v569
    %571 = vdwg.mxu0
    %572 = vmatpush.xpose.msra.mxu0 %v63
    %573 = vmatpush.xpose.msra.mxu0 %v62
    %574 = vmatpush.xpose.msra.mxu0 %v61
    %575 = vmatpush.xpose.msra.mxu0 %v60
    %576 = vmatpush.xpose.msra.mxu0 %v59
    %577 = vmatpush.xpose.msra.mxu0 %v58
    %578 = vmatpush.xpose.msra.mxu0 %v57
    %579 = vmatpush.xpose.msra.mxu0 %v56
    %580 = vmatpush.xpose.msra.mxu0 %v55
    %581 = vmatpush.xpose.msra.mxu0 %v54
    %582 = vmatpush.xpose.msra.mxu0 %v53
    %583 = vmatpush.xpose.msra.mxu0 %v52
    %584 = vmatpush.xpose.msra.mxu0 %v51
    %585 = vmatpush.xpose.msra.mxu0 %v50
    %586 = vmatpush.xpose.msra.mxu0 %v49
    %587 = vmatpush.xpose.msra.mxu0 %v48
    %588 = vmatmul.f32.gmra.mxu0 %v31
    %v589 = vpop.f32.mrf.mxu0
    %v590 = vadd.f32 0.0, %v589
    %591 = vdwg.mxu0
    %592 = vmatpush.xpose.msra.mxu0 %v79
    %593 = vmatpush.xpose.msra.mxu0 %v78
    %594 = vmatpush.xpose.msra.mxu0 %v77
    %595 = vmatpush.xpose.msra.mxu0 %v76
    %596 = vmatpush.xpose.msra.mxu0 %v75
    %597 = vmatpush.xpose.msra.mxu0 %v74
    %598 = vmatpush.xpose.msra.mxu0 %v73
    %599 = vmatpush.xpose.msra.mxu0 %v72
    %600 = vmatpush.xpose.msra.mxu0 %v71
    %601 = vmatpush.xpose.msra.mxu0 %v70
    %602 = vmatpush.xpose.msra.mxu0 %v69
    %603 = vmatpush.xpose.msra.mxu0 %v68
    %604 = vmatpush.xpose.msra.mxu0 %v67
    %605 = vmatpush.xpose.msra.mxu0 %v66
    %606 = vmatpush.xpose.msra.mxu0 %v65
    %607 = vmatpush.xpose.msra.mxu0 %v64
    %608 = vmatmul.f32.gmra.mxu0 %v31
    %v609 = vpop.f32.mrf.mxu0
    %v610 = vadd.f32 0.0, %v609
    %611 = vdwg.mxu0
    %612 = vmatpush.xpose.msra.mxu0 %v95
    %613 = vmatpush.xpose.msra.mxu0 %v94
    %614 = vmatpush.xpose.msra.mxu0 %v93
    %615 = vmatpush.xpose.msra.mxu0 %v92
    %616 = vmatpush.xpose.msra.mxu0 %v91
    %617 = vmatpush.xpose.msra.mxu0 %v90
    %618 = vmatpush.xpose.msra.mxu0 %v89
    %619 = vmatpush.xpose.msra.mxu0 %v88
    %620 = vmatpush.xpose.msra.mxu0 %v87
    %621 = vmatpush.xpose.msra.mxu0 %v86
    %622 = vmatpush.xpose.msra.mxu0 %v85
    %623 = vmatpush.xpose.msra.mxu0 %v84
    %624 = vmatpush.xpose.msra.mxu0 %v83
    %625 = vmatpush.xpose.msra.mxu0 %v82
    %626 = vmatpush.xpose.msra.mxu0 %v81
    %627 = vmatpush.xpose.msra.mxu0 %v80
    %628 = vmatmul.f32.gmra.mxu0 %v31
    %v629 = vpop.f32.mrf.mxu0
    %v630 = vadd.f32 0.0, %v629
    %631 = vdwg.mxu0
    %632 = vmatpush.xpose.msra.mxu0 %v111
    %633 = vmatpush.xpose.msra.mxu0 %v110
    %634 = vmatpush.xpose.msra.mxu0 %v109
    %635 = vmatpush.xpose.msra.mxu0 %v108
    %636 = vmatpush.xpose.msra.mxu0 %v107
    %637 = vmatpush.xpose.msra.mxu0 %v106
    %638 = vmatpush.xpose.msra.mxu0 %v105
    %639 = vmatpush.xpose.msra.mxu0 %v104
    %640 = vmatpush.xpose.msra.mxu0 %v103
    %641 = vmatpush.xpose.msra.mxu0 %v102
    %642 = vmatpush.xpose.msra.mxu0 %v101
    %643 = vmatpush.xpose.msra.mxu0 %v100
    %644 = vmatpush.xpose.msra.mxu0 %v99
    %645 = vmatpush.xpose.msra.mxu0 %v98
    %646 = vmatpush.xpose.msra.mxu0 %v97
    %647 = vmatpush.xpose.msra.mxu0 %v96
    %648 = vmatmul.f32.gmra.mxu0 %v31
    %v649 = vpop.f32.mrf.mxu0
    %v650 = vadd.f32 0.0, %v649
    %651 = vdwg.mxu0
    %652 = vmatpush.xpose.msra.mxu0 %v127
    %653 = vmatpush.xpose.msra.mxu0 %v126
    %654 = vmatpush.xpose.msra.mxu0 %v125
    %655 = vmatpush.xpose.msra.mxu0 %v124
    %656 = vmatpush.xpose.msra.mxu0 %v123
    %657 = vmatpush.xpose.msra.mxu0 %v122
    %658 = vmatpush.xpose.msra.mxu0 %v121
    %659 = vmatpush.xpose.msra.mxu0 %v120
    %660 = vmatpush.xpose.msra.mxu0 %v119
    %661 = vmatpush.xpose.msra.mxu0 %v118
    %662 = vmatpush.xpose.msra.mxu0 %v117
    %663 = vmatpush.xpose.msra.mxu0 %v116
    %664 = vmatpush.xpose.msra.mxu0 %v115
    %665 = vmatpush.xpose.msra.mxu0 %v114
    %666 = vmatpush.xpose.msra.mxu0 %v113
    %667 = vmatpush.xpose.msra.mxu0 %v112
    %668 = vmatmul.f32.gmra.mxu0 %v31
    %v669 = vpop.f32.mrf.mxu0
    %v670 = vadd.f32 0.0, %v669
    %671 = vdwg.mxu0
    %672 = vmatpush.xpose.msra.mxu0 %v143
    %673 = vmatpush.xpose.msra.mxu0 %v142
    %674 = vmatpush.xpose.msra.mxu0 %v141
    %675 = vmatpush.xpose.msra.mxu0 %v140
    %676 = vmatpush.xpose.msra.mxu0 %v139
    %677 = vmatpush.xpose.msra.mxu0 %v138
    %678 = vmatpush.xpose.msra.mxu0 %v137
    %679 = vmatpush.xpose.msra.mxu0 %v136
    %680 = vmatpush.xpose.msra.mxu0 %v135
    %681 = vmatpush.xpose.msra.mxu0 %v134
    %682 = vmatpush.xpose.msra.mxu0 %v133
    %683 = vmatpush.xpose.msra.mxu0 %v132
    %684 = vmatpush.xpose.msra.mxu0 %v131
    %685 = vmatpush.xpose.msra.mxu0 %v130
    %686 = vmatpush.xpose.msra.mxu0 %v129
    %687 = vmatpush.xpose.msra.mxu0 %v128
    %688 = vmatmul.f32.gmra.mxu0 %v31
    %v689 = vpop.f32.mrf.mxu0
    %v690 = vadd.f32 0.0, %v689
    %691 = vdwg.mxu0
    %692 = vmatpush.xpose.msra.mxu0 %v159
    %693 = vmatpush.xpose.msra.mxu0 %v158
    %694 = vmatpush.xpose.msra.mxu0 %v157
    %695 = vmatpush.xpose.msra.mxu0 %v156
    %696 = vmatpush.xpose.msra.mxu0 %v155
    %697 = vmatpush.xpose.msra.mxu0 %v154
    %698 = vmatpush.xpose.msra.mxu0 %v153
    %699 = vmatpush.xpose.msra.mxu0 %v152
    %700 = vmatpush.xpose.msra.mxu0 %v151
    %701 = vmatpush.xpose.msra.mxu0 %v150
    %702 = vmatpush.xpose.msra.mxu0 %v149
    %703 = vmatpush.xpose.msra.mxu0 %v148
    %704 = vmatpush.xpose.msra.mxu0 %v147
    %705 = vmatpush.xpose.msra.mxu0 %v146
    %706 = vmatpush.xpose.msra.mxu0 %v145
    %707 = vmatpush.xpose.msra.mxu0 %v144
    %708 = vmatmul.f32.gmra.mxu0 %v31
    %v709 = vpop.f32.mrf.mxu0
    %v710 = vadd.f32 0.0, %v709
    %711 = vdwg.mxu0
    %v712 = vmul.f32 %v570, %v175
    %v713 = vmul.f32 %v590, %v175
    %v714 = vmul.f32 %v610, %v175
    %v715 = vmul.f32 %v630, %v175
    %v716 = vmul.f32 %v650, %v175
    %v717 = vmul.f32 %v670, %v175
    %v718 = vmul.f32 %v690, %v175
    %v719 = vmul.f32 %v710, %v175
    %v720 = vperm.slane %v481, 0
    %v721 = vperm.slane %v491, 0
    %v722 = vperm.slane %v501, 0
    %v723 = vperm.slane %v511, 0
    %v724 = vperm.slane %v521, 0
    %v725 = vperm.slane %v531, 0
    %v726 = vperm.slane %v541, 0
    %v727 = vperm.slane %v551, 0
    %v728 = vmul.f32 %v712, %v720
    %v729 = vmul.f32 %v713, %v721
    %v730 = vmul.f32 %v714, %v722
    %v731 = vmul.f32 %v715, %v723
    %v732 = vmul.f32 %v716, %v724
    %v733 = vmul.f32 %v717, %v725
    %v734 = vmul.f32 %v718, %v726
    %v735 = vmul.f32 %v719, %v727
    %v736 = vmul.f32 %v728, %v728
    %v737 = vmul.f32 %v729, %v729
    %v738 = vmul.f32 %v730, %v730
    %v739 = vmul.f32 %v731, %v731
    %v740 = vmul.f32 %v732, %v732
    %v741 = vmul.f32 %v733, %v733
    %v742 = vmul.f32 %v734, %v734
    %v743 = vmul.f32 %v735, %v735
    %v744 = vsub.f32 1.0, %v736
    %v745 = vsub.f32 1.0, %v737
    %v746 = vsub.f32 1.0, %v738
    %v747 = vsub.f32 1.0, %v739
    %v748 = vsub.f32 1.0, %v740
    %v749 = vsub.f32 1.0, %v741
    %v750 = vsub.f32 1.0, %v742
    %v751 = vsub.f32 1.0, %v743
    %v752 = vmax.f32 %v744, 0.0
    %v753 = vmax.f32 %v745, 0.0
    %v754 = vmax.f32 %v746, 0.0
    %v755 = vmax.f32 %v747, 0.0
    %v756 = vmax.f32 %v748, 0.0
    %v757 = vmax.f32 %v749, 0.0
    %v758 = vmax.f32 %v750, 0.0
    %v759 = vmax.f32 %v751, 0.0
    %v760 = vrsqrt.pop %v752
    %v761 = vmul.f32 %v760, %v752
    %v762 = vmul.f32 %v761, %v760
    %v763 = vmul.f32 0.5, %v762
    %v764 = vsub.f32 1.5, %v763
    %v765 = vmul.f32 %v760, %v764
    %v766 = vmul.f32 %v752, %v765
    %vm767 = vcmp.eq.f32.partialorder %v752, inf
    %v768 = vsel %vm767, %v752, %v766
    %vm769 = vcmp.eq.f32.partialorder %v752, 0.0
    %v770 = vand.u32 %v752, 2147483648
    %v771 = vsel %vm769, %v770, %v768
    %v772 = vrsqrt.pop %v753
    %v773 = vmul.f32 %v772, %v753
    %v774 = vmul.f32 %v773, %v772
    %v775 = vmul.f32 0.5, %v774
    %v776 = vsub.f32 1.5, %v775
    %v777 = vmul.f32 %v772, %v776
    %v778 = vmul.f32 %v753, %v777
    %vm779 = vcmp.eq.f32.partialorder %v753, inf
    %v780 = vsel %vm779, %v753, %v778
    %vm781 = vcmp.eq.f32.partialorder %v753, 0.0
    %v782 = vand.u32 %v753, 2147483648
    %v783 = vsel %vm781, %v782, %v780
    %v784 = vrsqrt.pop %v754
    %v785 = vmul.f32 %v784, %v754
    %v786 = vmul.f32 %v785, %v784
    %v787 = vmul.f32 0.5, %v786
    %v788 = vsub.f32 1.5, %v787
    %v789 = vmul.f32 %v784, %v788
    %v790 = vmul.f32 %v754, %v789
    %vm791 = vcmp.eq.f32.partialorder %v754, inf
    %v792 = vsel %vm791, %v754, %v790
    %vm793 = vcmp.eq.f32.partialorder %v754, 0.0
    %v794 = vand.u32 %v754, 2147483648
    %v795 = vsel %vm793, %v794, %v792
    %v796 = vrsqrt.pop %v755
    %v797 = vmul.f32 %v796, %v755
    %v798 = vmul.f32 %v797, %v796
    %v799 = vmul.f32 0.5, %v798
    %v800 = vsub.f32 1.5, %v799
    %v801 = vmul.f32 %v796, %v800
    %v802 = vmul.f32 %v755, %v801
    %vm803 = vcmp.eq.f32.partialorder %v755, inf
    %v804 = vsel %vm803, %v755, %v802
    %vm805 = vcmp.eq.f32.partialorder %v755, 0.0
    %v806 = vand.u32 %v755, 2147483648
    %v807 = vsel %vm805, %v806, %v804
    %v808 = vrsqrt.pop %v756
    %v809 = vmul.f32 %v808, %v756
    %v810 = vmul.f32 %v809, %v808
    %v811 = vmul.f32 0.5, %v810
    %v812 = vsub.f32 1.5, %v811
    %v813 = vmul.f32 %v808, %v812
    %v814 = vmul.f32 %v756, %v813
    %vm815 = vcmp.eq.f32.partialorder %v756, inf
    %v816 = vsel %vm815, %v756, %v814
    %vm817 = vcmp.eq.f32.partialorder %v756, 0.0
    %v818 = vand.u32 %v756, 2147483648
    %v819 = vsel %vm817, %v818, %v816
    %v820 = vrsqrt.pop %v757
    %v821 = vmul.f32 %v820, %v757
    %v822 = vmul.f32 %v821, %v820
    %v823 = vmul.f32 0.5, %v822
    %v824 = vsub.f32 1.5, %v823
    %v825 = vmul.f32 %v820, %v824
    %v826 = vmul.f32 %v757, %v825
    %vm827 = vcmp.eq.f32.partialorder %v757, inf
    %v828 = vsel %vm827, %v757, %v826
    %vm829 = vcmp.eq.f32.partialorder %v757, 0.0
    %v830 = vand.u32 %v757, 2147483648
    %v831 = vsel %vm829, %v830, %v828
    %v832 = vrsqrt.pop %v758
    %v833 = vmul.f32 %v832, %v758
    %v834 = vmul.f32 %v833, %v832
    %v835 = vmul.f32 0.5, %v834
    %v836 = vsub.f32 1.5, %v835
    %v837 = vmul.f32 %v832, %v836
    %v838 = vmul.f32 %v758, %v837
    %vm839 = vcmp.eq.f32.partialorder %v758, inf
    %v840 = vsel %vm839, %v758, %v838
    %vm841 = vcmp.eq.f32.partialorder %v758, 0.0
    %v842 = vand.u32 %v758, 2147483648
    %v843 = vsel %vm841, %v842, %v840
    %v844 = vrsqrt.pop %v759
    %v845 = vmul.f32 %v844, %v759
    %v846 = vmul.f32 %v845, %v844
    %v847 = vmul.f32 0.5, %v846
    %v848 = vsub.f32 1.5, %v847
    %v849 = vmul.f32 %v844, %v848
    %v850 = vmul.f32 %v759, %v849
    %vm851 = vcmp.eq.f32.partialorder %v759, inf
    %v852 = vsel %vm851, %v759, %v850
    %vm853 = vcmp.eq.f32.partialorder %v759, 0.0
    %v854 = vand.u32 %v759, 2147483648
    %v855 = vsel %vm853, %v854, %v852
    %v856 = vmul.f32 %v728, 0.87758255
    %v857 = vmul.f32 %v729, 0.87758255
    %v858 = vmul.f32 %v730, 0.87758255
    %v859 = vmul.f32 %v731, 0.87758255
    %v860 = vmul.f32 %v732, 0.87758255
    %v861 = vmul.f32 %v733, 0.87758255
    %v862 = vmul.f32 %v734, 0.87758255
    %v863 = vmul.f32 %v735, 0.87758255
    %v864 = vmul.f32 %v771, 0.47942555
    %v865 = vmul.f32 %v783, 0.47942555
    %v866 = vmul.f32 %v795, 0.47942555
    %v867 = vmul.f32 %v807, 0.47942555
    %v868 = vmul.f32 %v819, 0.47942555
    %v869 = vmul.f32 %v831, 0.47942555
    %v870 = vmul.f32 %v843, 0.47942555
    %v871 = vmul.f32 %v855, 0.47942555
    %v872 = vsub.f32 %v856, %v864
    %v873 = vsub.f32 %v857, %v865
    %v874 = vsub.f32 %v858, %v866
    %v875 = vsub.f32 %v859, %v867
    %v876 = vsub.f32 %v860, %v868
    %v877 = vsub.f32 %v861, %v869
    %v878 = vsub.f32 %v862, %v870
    %v879 = vsub.f32 %v863, %v871
    %v880 = vsub.f32 %v728, -0.87758255
    %v881 = vsub.f32 %v729, -0.87758255
    %v882 = vsub.f32 %v730, -0.87758255
    %v883 = vsub.f32 %v731, -0.87758255
    %v884 = vsub.f32 %v732, -0.87758255
    %v885 = vsub.f32 %v733, -0.87758255
    %v886 = vsub.f32 %v734, -0.87758255
    %v887 = vsub.f32 %v735, -0.87758255
    %vm888 = vcmp.gt.f32.partialorder %v880, 0.0
    %vm889 = vcmp.gt.f32.partialorder %v881, 0.0
    %vm890 = vcmp.gt.f32.partialorder %v882, 0.0
    %vm891 = vcmp.gt.f32.partialorder %v883, 0.0
    %vm892 = vcmp.gt.f32.partialorder %v884, 0.0
    %vm893 = vcmp.gt.f32.partialorder %v885, 0.0
    %vm894 = vcmp.gt.f32.partialorder %v886, 0.0
    %vm895 = vcmp.gt.f32.partialorder %v887, 0.0
    %v896 = vsub.f32 %v728, 0.23971277
    %v897 = vsub.f32 %v729, 0.23971277
    %v898 = vsub.f32 %v730, 0.23971277
    %v899 = vsub.f32 %v731, 0.23971277
    %v900 = vsub.f32 %v732, 0.23971277
    %v901 = vsub.f32 %v733, 0.23971277
    %v902 = vsub.f32 %v734, 0.23971277
    %v903 = vsub.f32 %v735, 0.23971277
    %v904 = vsel %vm888, %v872, %v896
    %v905 = vsel %vm889, %v873, %v897
    %v906 = vsel %vm890, %v874, %v898
    %v907 = vsel %vm891, %v875, %v899
    %v908 = vsel %vm892, %v876, %v900
    %v909 = vsel %vm893, %v877, %v901
    %v910 = vsel %vm894, %v878, %v902
    %v911 = vsel %vm895, %v879, %v903
    %v912 = vlaneseq
    %v913 = vand.u32 %v912, 127
    %v914 = vadd.s32 %v913, 128
    %v915 = vadd.s32 %v913, 256
    %v916 = vadd.s32 %v913, 384
    %v917 = vadd.s32 %v913, 512
    %v918 = vadd.s32 %v913, 640
    %v919 = vadd.s32 %v913, 768
    %v920 = vadd.s32 %v913, 896
    %s921 = smul.u32 0, 1024
    %v922 = vstv %s921
    %v923 = vadd.s32 %v913, %v922
    %v924 = vadd.s32 %v914, %v922
    %v925 = vadd.s32 %v915, %v922
    %v926 = vadd.s32 %v916, %v922
    %v927 = vadd.s32 %v917, %v922
    %v928 = vadd.s32 %v918, %v922
    %v929 = vadd.s32 %v919, %v922
    %v930 = vadd.s32 %v920, %v922
    %v931 = vld [vmem:[%s1] sm:$0xf]
    %932 = vset.pattern.permute.xlu0 0
    %933 = vperm.xlu0 %932, %v931
    %v934 = vpop.permute.xlu0 %933
    %vm935 = vcmp.eq.s32.totalorder %v923, %v934
    %vm936 = vcmp.eq.s32.totalorder %v924, %v934
    %vm937 = vcmp.eq.s32.totalorder %v925, %v934
    %vm938 = vcmp.eq.s32.totalorder %v926, %v934
    %vm939 = vcmp.eq.s32.totalorder %v927, %v934
    %vm940 = vcmp.eq.s32.totalorder %v928, %v934
    %vm941 = vcmp.eq.s32.totalorder %v929, %v934
    %vm942 = vcmp.eq.s32.totalorder %v930, %v934
    %v943 = vsel %vm935, %v904, %v728
    %v944 = vsel %vm936, %v905, %v729
    %v945 = vsel %vm937, %v906, %v730
    %v946 = vsel %vm938, %v907, %v731
    %v947 = vsel %vm939, %v908, %v732
    %v948 = vsel %vm940, %v909, %v733
    %v949 = vsel %vm941, %v910, %v734
    %v950 = vsel %vm942, %v911, %v735
    %v951 = vmul.f32 %v943, 32.0
    %v952 = vmul.f32 %v944, 32.0
    %v953 = vmul.f32 %v945, 32.0
    %v954 = vmul.f32 %v946, 32.0
    %v955 = vmul.f32 %v947, 32.0
    %v956 = vmul.f32 %v948, 32.0
    %v957 = vmul.f32 %v949, 32.0
    %v958 = vmul.f32 %v950, 32.0
    %v967 = vrot.slane %v952, 4
    %v968 = vrot.slane %v954, 4
    %v969 = vrot.slane %v956, 4
    %v970 = vrot.slane %v958, 4
    %v971 = vsel %vm161, %v951, %v967
    %v972 = vsel %vm161, %v953, %v968
    %v973 = vsel %vm161, %v955, %v969
    %v974 = vsel %vm161, %v957, %v970
    %979 = vst [vmem:[#allocation5] sm:$0xff] %v971
    %980 = vst [vmem:[#allocation5 + $0x8] sm:$0xff] %v972
    %981 = vst [vmem:[#allocation5 + $0x10] sm:$0xff] %v973
    %982 = vst [vmem:[#allocation5 + $0x18] sm:$0xff] %v974
    // Predicated region
    $region18: #{tpu_custom_call.1} parent=1 // pred_check
      _
    $region19: #{tpu_custom_call.1} parent=1 // pred_check_branch
      %984 = sbr.rel (0) target = $region21
    $region20: #{tpu_custom_call.1} parent=1 // pred_region
      %986 = vsyncadd [#allocation4], 0
      %s988 = sshll.u32 [#allocation5], 4
      %s989 = int_to_ptr.vmem [resolvable:$true] %s988
      %s990 = sshll.u32 %s3, 4
      %s991 = int_to_ptr.hbm [resolvable:$true] %s990
      %993 = dma.vmem_to_hbm [thread:$0]  %s989, 512, %s991, [#allocation4]
    $region21: #{tpu_custom_call.1} parent=1 // pred_fallthru
      _
    // Predicated region
    $region22: #{tpu_custom_call.1} parent=1 // pred_check
      _
    $region23: #{tpu_custom_call.1} parent=1 // pred_check_branch
      %995 = sbr.rel (0) target = $region25
    $region24: #{tpu_custom_call.1} parent=1 // pred_region
      %997 = dma.done [#allocation4], 512
    $region25: #{tpu_custom_call.1} parent=1 // pred_fallthru
      _
    %998 = vsyncpa [#allocation3], 1
    %999 = vsyncpa [#allocation4], 1

</llo_original>
